<compile_context>
chip_gen: v7x
topology: tpu7x:2x2x1
jax: 0.10.0
libtpu: 0.0.40
codegen_flags: <defaults>
</compile_context>

<pallas_src>
import jax
import jax.numpy as jnp
from jax.experimental import pallas as pl
from jax.experimental.pallas import tpu as pltpu

EPS = 1e-5


# ---------------------------------------------------------------------------
# In-kernel helpers
# ---------------------------------------------------------------------------

def _mm_bf16(a, wk):
    """(tn, th, W, C) x (C, Co) -> (tn*th*W, Co) f32; bf16 MXU operands, f32 accumulation."""
    tn, th, w, c = a.shape
    a2 = a.astype(jnp.bfloat16).reshape(tn * th * w, c)
    return jnp.dot(a2, wk, preferred_element_type=jnp.float32)


def _conv3x1_tile(x, up_row, dn_row, w_ref):
    """3x1 conv along H for one (tn, th, W, C) tile.

    `up_row` / `dn_row` are the 1-row halos (row h-1 of the tile's first row / row h+1 of the
    tile's last row; zeros at the global boundary = the conv's zero padding). The three tap
    matmuls are accumulated into a single f32 value (no shifted whole-tile copies in HBM,
    only per-tile tap assembly).
    """
    tn, th, w, _ = x.shape
    co = w_ref.shape[2]
    x_m = jnp.concatenate([up_row, x[:, :-1]], axis=1)   # x[h-1]
    x_p = jnp.concatenate([x[:, 1:], dn_row], axis=1)    # x[h+1]
    acc = _mm_bf16(x_m, w_ref[0])
    acc = acc + _mm_bf16(x, w_ref[1])
    acc = acc + _mm_bf16(x_p, w_ref[2])
    return acc.reshape(tn, th, w, co)


def _write_partial_stats(z, s_ref, q_ref):
    """Per-tile partial sum / sum-of-squares (per channel) for the two-phase BN reduction."""
    s_ref[...] = jnp.sum(z, axis=(0, 1, 2), keepdims=True)        # (1,1,1,C)
    q_ref[...] = jnp.sum(z * z, axis=(0, 1, 2), keepdims=True)    # (1,1,1,C)


# ---------------------------------------------------------------------------
# Kernels
# ---------------------------------------------------------------------------

def _conv_stats_kernel(x_ref, up_ref, dn_ref, w_ref, z_ref, s_ref, q_ref):
    """Pass 1: z1 = conv1(x); emit per-tile BN1 partial stats."""
    z = _conv3x1_tile(x_ref[...], up_ref[...], dn_ref[...], w_ref)
    z_ref[...] = z
    _write_partial_stats(z, s_ref, q_ref)


def _bn_relu_conv_stats_kernel(z1_ref, up_ref, dn_ref, w_ref, scale_ref, shift_ref,
                               z2_ref, s_ref, q_ref):
    """Pass 2: a = relu(bn1(z1)) (folded scale/shift); z2 = conv2(a); per-tile BN2 stats."""
    scale = scale_ref[...]
    shift = shift_ref[...]
    a = jnp.maximum(z1_ref[...] * scale + shift, 0.0)
    a_up = jnp.maximum(up_ref[...] * scale + shift, 0.0)
    a_dn = jnp.maximum(dn_ref[...] * scale + shift, 0.0)
    # conv2's zero padding applies to relu(bn1(z1)); at the global top/bottom the halo row must
    # be exactly 0 (not relu(shift)).
    j = pl.program_id(1)
    a_up = jnp.where(j == 0, 0.0, a_up)
    a_dn = jnp.where(j == pl.num_programs(1) - 1, 0.0, a_dn)
    z = _conv3x1_tile(a, a_up, a_dn, w_ref)
    z2_ref[...] = z
    _write_partial_stats(z, s_ref, q_ref)


def _bn_add_relu_kernel(z2_ref, x_ref, scale_ref, shift_ref, o_ref):
    """Pass 3 (pointwise): out = relu(bn2(z2) + x)."""
    y = z2_ref[...] * scale_ref[...] + shift_ref[...] + x_ref[...]
    o_ref[...] = jnp.maximum(y, 0.0)


# ---------------------------------------------------------------------------
# Host-side helpers
# ---------------------------------------------------------------------------

def _largest_divisor_leq(n, target):
    target = max(1, min(n, target))
    for d in range(target, 0, -1):
        if n % d == 0:
            return d
    return 1


def _halo_rows(a, tile_h):
    """Build 1-row halos for H tiling of `a` (N, H, W, C).

    up[:, j] = a[:, j*th - 1] (zeros for j == 0); dn[:, j] = a[:, (j+1)*th] (zeros for last j).
    Only 2 rows per tile are gathered (no full padded copy of `a`).
    """
    n, h, w, c = a.shape
    zero = jnp.zeros((n, 1, w, c), a.dtype)
    up = jnp.concatenate([zero, a[:, tile_h - 1:h - 1:tile_h]], axis=1)
    dn = jnp.concatenate([a[:, tile_h:h:tile_h], zero], axis=1)
    return up, dn


def _fold_bn(sum_arr, sq_arr, gamma, beta, count):
    """Finalize two-phase BN stats -> per-channel scale/shift (training-mode, biased var)."""
    s = jnp.sum(sum_arr, axis=(0, 1, 2))          # (C,)
    q = jnp.sum(sq_arr, axis=(0, 1, 2))           # (C,)
    mean = s / count
    var = q / count - mean * mean                  # single-pass biased variance
    scale = gamma * jax.lax.rsqrt(var + EPS)
    shift = beta - mean * scale
    c = gamma.shape[0]
    return scale.reshape(1, 1, 1, c), shift.reshape(1, 1, 1, c)
    # TODO(synk): running_mean/running_var momentum updates (training bookkeeping) not emitted.


# ---------------------------------------------------------------------------
# Wrapper
# ---------------------------------------------------------------------------

def residual_block(x_nchw, params, tile_n=None, tile_h=None):
    """x_nchw: (N, C, H, W) float32. Returns (N, C, H, W) float32."""
    w1, w2, g1, b1, g2, b2 = params
    n, c, h, w = x_nchw.shape

    # NCHW -> NHWC once at the boundary (a full net would keep NHWC end-to-end).
    x = jnp.transpose(x_nchw, (0, 2, 3, 1)).astype(jnp.float32)     # (N, H, W, C)
    w1b = w1.astype(jnp.bfloat16)
    w2b = w2.astype(jnp.bfloat16)

    if tile_h is None:
        # Budget the activation tile to ~128K elems so tile + temps + double buffers stay far
        # under the 32 MiB scoped-VMEM limit (v7x-safe).
        tile_h = _largest_divisor_leq(h, max(2, (128 * 1024) // max(1, w * c)))
        if tile_h < 2:
            tile_h = h
    if tile_n is None:
        tile_n = 1
    assert n % tile_n == 0 and h % tile_h == 0, "tile sizes must divide N and H"
    gn, gh = n // tile_n, h // tile_h

    act = pl.BlockSpec((tile_n, tile_h, w, c), lambda i, j: (i, j, 0, 0))
    halo = pl.BlockSpec((tile_n, 1, w, c), lambda i, j: (i, j, 0, 0))
    wsp = pl.BlockSpec((3, c, c), lambda i, j: (0, 0, 0))
    vec = pl.BlockSpec((1, 1, 1, c), lambda i, j: (0, 0, 0, 0))
    stat = pl.BlockSpec((1, 1, 1, c), lambda i, j: (i, j, 0, 0))

    cparams = pltpu.CompilerParams(
        dimension_semantics=("parallel", "parallel"),
        vmem_limit_bytes=32 * 1024 * 1024,
    )

    # Pass 1: conv1 + BN1 partial stats.
    x_up, x_dn = _halo_rows(x, tile_h)
    z1, s1, q1 = pl.pallas_call(
        _conv_stats_kernel,
        grid=(gn, gh),
        in_specs=[act, halo, halo, wsp],
        out_specs=(act, stat, stat),
        out_shape=(jax.ShapeDtypeStruct((n, h, w, c), jnp.float32),
                   jax.ShapeDtypeStruct((gn, gh, 1, c), jnp.float32),
                   jax.ShapeDtypeStruct((gn, gh, 1, c), jnp.float32)),
        compiler_params=cparams,
    )(x, x_up, x_dn, w1b)
    scale1, shift1 = _fold_bn(s1, q1, g1, b1, n * h * w)

    # Pass 2: bn1 + relu + conv2 + BN2 partial stats.
    z1_up, z1_dn = _halo_rows(z1, tile_h)
    z2, s2, q2 = pl.pallas_call(
        _bn_relu_conv_stats_kernel,
        grid=(gn, gh),
        in_specs=[act, halo, halo, wsp, vec, vec],
        out_specs=(act, stat, stat),
        out_shape=(jax.ShapeDtypeStruct((n, h, w, c), jnp.float32),
                   jax.ShapeDtypeStruct((gn, gh, 1, c), jnp.float32),
                   jax.ShapeDtypeStruct((gn, gh, 1, c), jnp.float32)),
        compiler_params=cparams,
    )(z1, z1_up, z1_dn, w2b, scale1, shift1)
    scale2, shift2 = _fold_bn(s2, q2, g2, b2, n * h * w)

    # Pass 3: bn2 + identity shortcut + relu (pointwise, fully pipelined).
    out = pl.pallas_call(
        _bn_add_relu_kernel,
        grid=(gn, gh),
        in_specs=[act, act, vec, vec],
        out_specs=act,
        out_shape=jax.ShapeDtypeStruct((n, h, w, c), jnp.float32),
        compiler_params=cparams,
    )(z2, x, scale2, shift2)

    return jnp.transpose(out, (0, 3, 1, 2))      # NHWC -> NCHW


# ---------------------------------------------------------------------------
# Pure-JAX reference (same math; conv operands cast to bf16 to mirror the kernel's MXU precision;
# PyTorch's f32 conv differs from this only by ~1e-3 relative bf16 rounding).
# ---------------------------------------------------------------------------

def residual_block_ref(x_nchw, params):
    w1, w2, g1, b1, g2, b2 = params
    x = jnp.transpose(x_nchw, (0, 2, 3, 1)).astype(jnp.float32)

    def conv(xx, wk):
        np_, hp, wp, cp = xx.shape
        zero = jnp.zeros_like(xx[:, :1])
        xm = jnp.concatenate([zero, xx[:, :-1]], axis=1)
        xp = jnp.concatenate([xx[:, 1:], zero], axis=1)

        def mm(a, wkk):
            return jnp.dot(a.astype(jnp.bfloat16).reshape(-1, cp),
                           wkk.astype(jnp.bfloat16),
                           preferred_element_type=jnp.float32)

        y = mm(xm, wk[0]) + mm(xx, wk[1]) + mm(xp, wk[2])
        return y.reshape(np_, hp, wp, wk.shape[2])

    def bn(y, gamma, beta):
        mean = jnp.mean(y, axis=(0, 1, 2), keepdims=True)
        var = jnp.mean((y - mean) ** 2, axis=(0, 1, 2), keepdims=True)
        cdim = gamma.shape[0]
        return ((y - mean) * jax.lax.rsqrt(var + EPS) * gamma.reshape(1, 1, 1, cdim)
                + beta.reshape(1, 1, 1, cdim))

    y = jnp.maximum(bn(conv(x, w1), g1, b1), 0.0)
    y = bn(conv(y, w2), g2, b2)
    y = jnp.maximum(y + x, 0.0)
    return jnp.transpose(y, (0, 3, 1, 2))


def make_params(key, c):
    k1, k2, k3, k4, k5, k6 = jax.random.split(key, 6)
    # Torch Conv2d weight layout is (out, in, 3, 1); convert to kernel layout (kh, cin, cout).
    w1_t = 0.2 * jax.random.normal(k1, (c, c, 3, 1), jnp.float32)
    w2_t = 0.2 * jax.random.normal(k2, (c, c, 3, 1), jnp.float32)
    w1 = jnp.transpose(w1_t[:, :, :, 0], (2, 1, 0))
    w2 = jnp.transpose(w2_t[:, :, :, 0], (2, 1, 0))
    # BatchNorm affine params (torch default gamma=1, beta=0; perturb deterministically).
    g1 = 1.0 + 0.1 * jax.random.normal(k3, (c,), jnp.float32)
    b1 = 0.1 * jax.random.normal(k4, (c,), jnp.float32)
    g2 = 1.0 + 0.1 * jax.random.normal(k5, (c,), jnp.float32)
    b2 = 0.1 * jax.random.normal(k6, (c,), jnp.float32)
    return (w1, w2, g1, b1, g2, b2)


if __name__ == "__main__":
    N, C, H, W = 2, 4, 16, 16           # in_channel == out_channel, stride=1, shortcut=None
    key = jax.random.PRNGKey(0)
    k_x, k_p = jax.random.split(key)
    x = jax.random.normal(k_x, (N, C, H, W), jnp.float32)
    params = make_params(k_p, C)

    # tile_h=8 -> a (2, 2) grid so the tiling / halo / two-phase BN path is actually exercised.
    out = jax.block_until_ready(residual_block(x, params, tile_n=1, tile_h=8))
    ref = jax.block_until_ready(residual_block_ref(x, params))

    assert out.shape == (N, C, H, W)
    import numpy as np
    np.testing.assert_allclose(np.asarray(out), np.asarray(ref), rtol=1e-2, atol=1e-2)

    print("KERNEL_OK")
</pallas_src>

<mosaic_0001>
module attributes {stable_mosaic.version = 11 : i64} {
  func.func @_conv_stats_kernel(%arg0: i32, %arg1: i32, %arg2: memref<1x8x16x4xf32, #tpu.memory_space<vmem>>, %arg3: memref<1x1x16x4xf32, #tpu.memory_space<vmem>>, %arg4: memref<1x1x16x4xf32, #tpu.memory_space<vmem>>, %arg5: memref<3x4x4xbf16, #tpu.memory_space<vmem>>, %arg6: memref<1x8x16x4xf32, #tpu.memory_space<vmem>>, %arg7: memref<1x1x1x4xf32, #tpu.memory_space<vmem>>, %arg8: memref<1x1x1x4xf32, #tpu.memory_space<vmem>>) attributes {dimension_semantics = [#tpu.dimension_semantics<parallel>, #tpu.dimension_semantics<parallel>], iteration_bounds = array<i64: 2, 2>, scalar_prefetch = 0 : i64, scratch_operands = 0 : i64, tpu.core_type = #tpu.core_type<tc>, window_params = [{transform_indices = @transform_0, window_bounds = array<i64: 1, 8, 16, 4>}, {transform_indices = @transform_1, window_bounds = array<i64: 1, 1, 16, 4>}, {transform_indices = @transform_2, window_bounds = array<i64: 1, 1, 16, 4>}, {pipeline_mode = #tpu.pipeline_mode<synchronous>, transform_indices = @transform_3, window_bounds = array<i64: 3, 4, 4>}, {transform_indices = @transform_4, window_bounds = array<i64: 1, 8, 16, 4>}, {transform_indices = @transform_5, window_bounds = array<i64: 1, 1, 1, 4>}, {transform_indices = @transform_6, window_bounds = array<i64: 1, 1, 1, 4>}]} {
    %c0 = arith.constant 0 : index
    %c0_0 = arith.constant 0 : index
    %c0_1 = arith.constant 0 : index
    %c0_2 = arith.constant 0 : index
    %0 = vector.load %arg2[%c0, %c0_0, %c0_1, %c0_2] : memref<1x8x16x4xf32, #tpu.memory_space<vmem>>, vector<1x8x16x4xf32>
    %c0_3 = arith.constant 0 : index
    %c0_4 = arith.constant 0 : index
    %c0_5 = arith.constant 0 : index
    %c0_6 = arith.constant 0 : index
    %1 = vector.load %arg3[%c0_3, %c0_4, %c0_5, %c0_6] : memref<1x1x16x4xf32, #tpu.memory_space<vmem>>, vector<1x1x16x4xf32>
    %c0_7 = arith.constant 0 : index
    %c0_8 = arith.constant 0 : index
    %c0_9 = arith.constant 0 : index
    %c0_10 = arith.constant 0 : index
    %2 = vector.load %arg4[%c0_7, %c0_8, %c0_9, %c0_10] : memref<1x1x16x4xf32, #tpu.memory_space<vmem>>, vector<1x1x16x4xf32>
    %3 = vector.extract_strided_slice %0 {offsets = [0, 0, 0, 0], sizes = [1, 7, 16, 4], strides = [1, 1, 1, 1]} : vector<1x8x16x4xf32> to vector<1x7x16x4xf32>
    %4 = tpu.concatenate %1, %3 in 1 : vector<1x1x16x4xf32>, vector<1x7x16x4xf32> -> vector<1x8x16x4xf32>
    %5 = vector.extract_strided_slice %0 {offsets = [0, 1, 0, 0], sizes = [1, 7, 16, 4], strides = [1, 1, 1, 1]} : vector<1x8x16x4xf32> to vector<1x7x16x4xf32>
    %6 = tpu.concatenate %5, %2 in 1 : vector<1x7x16x4xf32>, vector<1x1x16x4xf32> -> vector<1x8x16x4xf32>
    %c0_11 = arith.constant 0 : index
    %c0_12 = arith.constant 0 : index
    %c0_13 = arith.constant 0 : index
    %7 = vector.load %arg5[%c0_11, %c0_12, %c0_13] : memref<3x4x4xbf16, #tpu.memory_space<vmem>>, vector<1x4x4xbf16>
    %8 = vector.shape_cast %7 : vector<1x4x4xbf16> to vector<4x4xbf16>
    %9 = arith.truncf %4 : vector<1x8x16x4xf32> to vector<1x8x16x4xbf16>
    %10 = vector.shape_cast %9 : vector<1x8x16x4xbf16> to vector<128x4xbf16>
    %cst = arith.constant dense<0.000000e+00> : vector<128x4xf32>
    %11 = tpu.matmul %10, %8, %cst {dimension_numbers = #tpu.dot_dimension_numbers<[1], [0], [0], [1], [0, 0, 1, 1], [], []>} : vector<128x4xbf16>, vector<4x4xbf16>, vector<128x4xf32> -> vector<128x4xf32>
    %c1 = arith.constant 1 : index
    %c0_14 = arith.constant 0 : index
    %c0_15 = arith.constant 0 : index
    %12 = vector.load %arg5[%c1, %c0_14, %c0_15] : memref<3x4x4xbf16, #tpu.memory_space<vmem>>, vector<1x4x4xbf16>
    %13 = vector.shape_cast %12 : vector<1x4x4xbf16> to vector<4x4xbf16>
    %14 = arith.truncf %0 : vector<1x8x16x4xf32> to vector<1x8x16x4xbf16>
    %15 = vector.shape_cast %14 : vector<1x8x16x4xbf16> to vector<128x4xbf16>
    %cst_16 = arith.constant dense<0.000000e+00> : vector<128x4xf32>
    %16 = tpu.matmul %15, %13, %cst_16 {dimension_numbers = #tpu.dot_dimension_numbers<[1], [0], [0], [1], [0, 0, 1, 1], [], []>} : vector<128x4xbf16>, vector<4x4xbf16>, vector<128x4xf32> -> vector<128x4xf32>
    %17 = arith.addf %11, %16 : vector<128x4xf32>
    %c2 = arith.constant 2 : index
    %c0_17 = arith.constant 0 : index
    %c0_18 = arith.constant 0 : index
    %18 = vector.load %arg5[%c2, %c0_17, %c0_18] : memref<3x4x4xbf16, #tpu.memory_space<vmem>>, vector<1x4x4xbf16>
    %19 = vector.shape_cast %18 : vector<1x4x4xbf16> to vector<4x4xbf16>
    %20 = arith.truncf %6 : vector<1x8x16x4xf32> to vector<1x8x16x4xbf16>
    %21 = vector.shape_cast %20 : vector<1x8x16x4xbf16> to vector<128x4xbf16>
    %cst_19 = arith.constant dense<0.000000e+00> : vector<128x4xf32>
    %22 = tpu.matmul %21, %19, %cst_19 {dimension_numbers = #tpu.dot_dimension_numbers<[1], [0], [0], [1], [0, 0, 1, 1], [], []>} : vector<128x4xbf16>, vector<4x4xbf16>, vector<128x4xf32> -> vector<128x4xf32>
    %23 = arith.addf %17, %22 : vector<128x4xf32>
    %24 = vector.shape_cast %23 : vector<128x4xf32> to vector<1x8x16x4xf32>
    %c0_20 = arith.constant 0 : index
    %c0_21 = arith.constant 0 : index
    %c0_22 = arith.constant 0 : index
    %c0_23 = arith.constant 0 : index
    %25 = vector.load %arg6[%c0_20, %c0_21, %c0_22, %c0_23] : memref<1x8x16x4xf32, #tpu.memory_space<vmem>>, vector<1x8x16x4xf32>
    tpu.vector_store %arg6[%c0_20, %c0_21, %c0_22, %c0_23], %24 {strides = array<i32>} : memref<1x8x16x4xf32, #tpu.memory_space<vmem>>, vector<1x8x16x4xf32>,
    %cst_24 = arith.constant dense<0.000000e+00> : vector<4xf32>
    %26 = vector.multi_reduction <add>, %24, %cst_24 [0, 1, 2] : vector<1x8x16x4xf32> to vector<4xf32>
    %27 = vector.shape_cast %26 : vector<4xf32> to vector<1x1x1x4xf32>
    %c0_25 = arith.constant 0 : index
    %c0_26 = arith.constant 0 : index
    %c0_27 = arith.constant 0 : index
    %c0_28 = arith.constant 0 : index
    %28 = vector.load %arg7[%c0_25, %c0_26, %c0_27, %c0_28] : memref<1x1x1x4xf32, #tpu.memory_space<vmem>>, vector<1x1x1x4xf32>
    tpu.vector_store %arg7[%c0_25, %c0_26, %c0_27, %c0_28], %27 {strides = array<i32>} : memref<1x1x1x4xf32, #tpu.memory_space<vmem>>, vector<1x1x1x4xf32>,
    %29 = arith.mulf %24, %24 : vector<1x8x16x4xf32>
    %cst_29 = arith.constant dense<0.000000e+00> : vector<4xf32>
    %30 = vector.multi_reduction <add>, %29, %cst_29 [0, 1, 2] : vector<1x8x16x4xf32> to vector<4xf32>
    %31 = vector.shape_cast %30 : vector<4xf32> to vector<1x1x1x4xf32>
    %c0_30 = arith.constant 0 : index
    %c0_31 = arith.constant 0 : index
    %c0_32 = arith.constant 0 : index
    %c0_33 = arith.constant 0 : index
    %32 = vector.load %arg8[%c0_30, %c0_31, %c0_32, %c0_33] : memref<1x1x1x4xf32, #tpu.memory_space<vmem>>, vector<1x1x1x4xf32>
    tpu.vector_store %arg8[%c0_30, %c0_31, %c0_32, %c0_33], %31 {strides = array<i32>} : memref<1x1x1x4xf32, #tpu.memory_space<vmem>>, vector<1x1x1x4xf32>,
    return
  }
  func.func @transform_0(%arg0: i32, %arg1: i32) -> (i32, i32, i32, i32) {
    %c0_i32 = arith.constant 0 : i32
    %c0_i32_0 = arith.constant 0 : i32
    %c0_i32_1 = arith.constant 0 : i32
    return %arg0, %arg1, %c0_i32, %c0_i32_0 : i32, i32, i32, i32
  }
  func.func @transform_1(%arg0: i32, %arg1: i32) -> (i32, i32, i32, i32) {
    %c0_i32 = arith.constant 0 : i32
    %c0_i32_0 = arith.constant 0 : i32
    %c0_i32_1 = arith.constant 0 : i32
    return %arg0, %arg1, %c0_i32, %c0_i32_0 : i32, i32, i32, i32
  }
  func.func @transform_2(%arg0: i32, %arg1: i32) -> (i32, i32, i32, i32) {
    %c0_i32 = arith.constant 0 : i32
    %c0_i32_0 = arith.constant 0 : i32
    %c0_i32_1 = arith.constant 0 : i32
    return %arg0, %arg1, %c0_i32, %c0_i32_0 : i32, i32, i32, i32
  }
  func.func @transform_3(%arg0: i32, %arg1: i32) -> (i32, i32, i32) {
    %c0_i32 = arith.constant 0 : i32
    %c0_i32_0 = arith.constant 0 : i32
    %c0_i32_1 = arith.constant 0 : i32
    %c0_i32_2 = arith.constant 0 : i32
    return %c0_i32, %c0_i32_0, %c0_i32_1 : i32, i32, i32
  }
  func.func @transform_4(%arg0: i32, %arg1: i32) -> (i32, i32, i32, i32) {
    %c0_i32 = arith.constant 0 : i32
    %c0_i32_0 = arith.constant 0 : i32
    %c0_i32_1 = arith.constant 0 : i32
    return %arg0, %arg1, %c0_i32, %c0_i32_0 : i32, i32, i32, i32
  }
  func.func @transform_5(%arg0: i32, %arg1: i32) -> (i32, i32, i32, i32) {
    %c0_i32 = arith.constant 0 : i32
    %c0_i32_0 = arith.constant 0 : i32
    %c0_i32_1 = arith.constant 0 : i32
    return %arg0, %arg1, %c0_i32, %c0_i32_0 : i32, i32, i32, i32
  }
  func.func @transform_6(%arg0: i32, %arg1: i32) -> (i32, i32, i32, i32) {
    %c0_i32 = arith.constant 0 : i32
    %c0_i32_0 = arith.constant 0 : i32
    %c0_i32_1 = arith.constant 0 : i32
    return %arg0, %arg1, %c0_i32, %c0_i32_0 : i32, i32, i32, i32
  }
}

</mosaic_0001>

<llo_original>
// kernel: tpu_custom_call.1
$region0: #{tpu_custom_call.1}
  #allocation0 [shape = 'u32[]', space=smem, size = 0x4, offset = 0x4, fixed_abs, tag = 'smem constant byte address 0x4 - core index']
  #allocation1 [shape = 'u32[144,128]{1,0:T(1,128)}', space=vmem, size = 0x12000, scoped, tag = 'internal scratch']
  %s0 = inlined_call_operand.vmem [shape: f32[2,16,16,4], index: 0, kind: input, shape index: {}]
  %s1 = inlined_call_operand.vmem [shape: f32[2,2,16,4], index: 1, kind: input, shape index: {}]
  %s2 = inlined_call_operand.vmem [shape: f32[2,2,16,4], index: 2, kind: input, shape index: {}]
  %s3 = inlined_call_operand.vmem [shape: bf16[3,4,4], index: 3, kind: input, shape index: {}]
  %s4 = inlined_call_operand.vmem [shape: f32[2,16,16,4], index: 4, kind: output, shape index: {0}]
  %s5 = inlined_call_operand.hbm [shape: f32[2,2,1,4], index: 5, kind: output, shape index: {1}]
  %s6 = inlined_call_operand.hbm [shape: f32[2,2,1,4], index: 6, kind: output, shape index: {2}]
  %7 = xla_tuple %s4, %s5, %s6
  %s8 = sld [smem:[#allocation0]]
  $region65: #{tpu_custom_call.1} parent=0
    _
  %s10 = ssub.s32 1, %s8
  %s11 = scalar_select 0, %s10, %s8
  $region1: #{tpu_custom_call.1} parent=0
    #allocation2 [shape = 'u8[1024]{0}', space=vmem, size = 0x400, scoped, tag = 'output window, operand 1']
    #allocation3 [shape = 's32[2]{0}', space=sflag, size = 0x8, scoped, tag = 'scoped memory for tpu_custom_call.1']
    #allocation4 [shape = 'u8[1024]{0}', space=vmem, size = 0x400, scoped, tag = 'output window, operand 2']
    #allocation5 [shape = 's32[2]{0}', space=sflag, size = 0x8, scoped, tag = 'scoped memory for tpu_custom_call.1']
    %12 = vsyncpa [#allocation3], 0
    %s13 = scalar_lea.sflag [#allocation3], 1
    %14 = vsyncpa %s13, 0
    %15 = vsyncpa [#allocation5], 0
    %s16 = scalar_lea.sflag [#allocation5], 1
    %17 = vsyncpa %s16, 0
    loop: start=0, step=1, limit=6
    $region2: #{tpu_custom_call.1} parent=1 // loop_pre_header
      _
    $region3: #{tpu_custom_call.1} parent=1 // loop_header
      %s19 = sphi 0, %s23
      %p20 = scmp.ge.s32.totalorder %s19, 6
      %s26 = sphi 0, %s38
      %s27 = sphi 0, %s34
      %s28 = sphi 0, %s26
      %s29 = sphi 0, %s27
      %s30 = sphi 0, %s28
      %s31 = sphi 0, %s29
      %s43 = sphi 0, %s45
      %s46 = sphi 0, %s43
      %s47 = sphi 0, %s46
      %s63 = sphi 0, %s47
      %s71 = sphi 0, %s73
      %s74 = sphi 0, %s71
      %s75 = sphi 0, %s74
      %s91 = sphi 0, %s75
      %s99 = sphi 0, %s101
      %s102 = sphi 0, %s99
      %s103 = sphi 0, %s102
      %s119 = sphi 0, %s103
      %s123 = sphi 0, %s123
      %s125 = sphi 0, %s123
      %s126 = sphi 0, %s125
      %s140 = sphi 0, %s126
      %s148 = sphi 0, %s150
      %s151 = sphi 0, %s148
      %s152 = sphi 0, %s151
      %s168 = sphi 0, %s152
      %s176 = sphi 0, %s178
      %s179 = sphi 0, %s176
      %s180 = sphi 0, %s179
      %s196 = sphi 0, %s180
      %s204 = sphi 0, %s206
      %s207 = sphi 0, %s204
      %s208 = sphi 0, %s207
      %s224 = sphi 0, %s208
    $region4: #{tpu_custom_call.1} parent=1 // loop_header_branch
      %22 = sbr.rel (%p20) target = $region8
    $region5: #{tpu_custom_call.1} parent=1 // loop_body
      %s24 = ssub.s32 %s19, 1
      %s25 = ssub.s32 %s19, 2
      %s32 = sadd.s32 1, %s27
      %p33 = scmp.ge.s32.totalorder %s32, 2
      %s34 = scalar_select %p33, 0, %s32
      %s35 = sadd.s32 1, %s26
      %s36 = scalar_select %p33, %s35, %s26
      %p37 = scmp.ge.s32.totalorder %s36, 2
      %s38 = scalar_select %p37, 0, %s36
      %s39 = ssub.s32 %s26, %s38
      %s40 = ssub.s32 %s27, %s34
      %s41 = sor.u32 %s39, %s40
      %p42 = scmp.eq.s32.totalorder %s41, 0
      %s44 = sadd.s32 %s43, 1
      %s45 = scalar_select %p42, %s43, %s44
      %p48 = pneg %p42
      %p49 = scmp.eq.s32.totalorder %s19, 3
      %p50 = por %p48, %p49
      %p51 = scmp.ne.s32.totalorder %s43, %s46
      %p52 = scmp.eq.s32.totalorder %s19, 0
      %p53 = por %p51, %p52
      %p54 = scmp.ne.s32.totalorder %s43, %s46
      %p55 = scmp.eq.s32.totalorder %s24, 3
      %p56 = por %p54, %p55
      %p57 = scmp.ne.s32.totalorder %s46, %s47
      %p58 = scmp.eq.s32.totalorder %s24, 0
      %p59 = por %p57, %p58
      %p60 = scmp.ne.s32.totalorder %s46, %s47
      %p61 = scmp.eq.s32.totalorder %s25, 3
      %p62 = por %p60, %p61
      %p64 = scmp.ne.s32.totalorder %s47, %s63
      %p65 = scmp.eq.s32.totalorder %s25, 0
      %p66 = por %p64, %p65
      %s67 = ssub.s32 %s26, %s38
      %s68 = ssub.s32 %s27, %s34
      %s69 = sor.u32 %s67, %s68
      %p70 = scmp.eq.s32.totalorder %s69, 0
      %s72 = sadd.s32 %s71, 1
      %s73 = scalar_select %p70, %s71, %s72
      %p76 = pneg %p70
      %p77 = scmp.eq.s32.totalorder %s19, 3
      %p78 = por %p76, %p77
      %p79 = scmp.ne.s32.totalorder %s71, %s74
      %p80 = scmp.eq.s32.totalorder %s19, 0
      %p81 = por %p79, %p80
      %p82 = scmp.ne.s32.totalorder %s71, %s74
      %p83 = scmp.eq.s32.totalorder %s24, 3
      %p84 = por %p82, %p83
      %p85 = scmp.ne.s32.totalorder %s74, %s75
      %p86 = scmp.eq.s32.totalorder %s24, 0
      %p87 = por %p85, %p86
      %p88 = scmp.ne.s32.totalorder %s74, %s75
      %p89 = scmp.eq.s32.totalorder %s25, 3
      %p90 = por %p88, %p89
      %p92 = scmp.ne.s32.totalorder %s75, %s91
      %p93 = scmp.eq.s32.totalorder %s25, 0
      %p94 = por %p92, %p93
      %s95 = ssub.s32 %s26, %s38
      %s96 = ssub.s32 %s27, %s34
      %s97 = sor.u32 %s95, %s96
      %p98 = scmp.eq.s32.totalorder %s97, 0
      %s100 = sadd.s32 %s99, 1
      %s101 = scalar_select %p98, %s99, %s100
      %p104 = pneg %p98
      %p105 = scmp.eq.s32.totalorder %s19, 3
      %p106 = por %p104, %p105
      %p107 = scmp.ne.s32.totalorder %s99, %s102
      %p108 = scmp.eq.s32.totalorder %s19, 0
      %p109 = por %p107, %p108
      %p110 = scmp.ne.s32.totalorder %s99, %s102
      %p111 = scmp.eq.s32.totalorder %s24, 3
      %p112 = por %p110, %p111
      %p113 = scmp.ne.s32.totalorder %s102, %s103
      %p114 = scmp.eq.s32.totalorder %s24, 0
      %p115 = por %p113, %p114
      %p116 = scmp.ne.s32.totalorder %s102, %s103
      %p117 = scmp.eq.s32.totalorder %s25, 3
      %p118 = por %p116, %p117
      %p120 = scmp.ne.s32.totalorder %s103, %s119
      %p121 = scmp.eq.s32.totalorder %s25, 0
      %p122 = por %p120, %p121
      %s124 = sadd.s32 %s123, 1
      %p127 = scmp.eq.s32.totalorder %s19, 3
      %p128 = scmp.ne.s32.totalorder %s123, %s125
      %p129 = scmp.eq.s32.totalorder %s19, 0
      %p130 = por %p128, %p129
      %p131 = scmp.ne.s32.totalorder %s123, %s125
      %p132 = scmp.eq.s32.totalorder %s24, 3
      %p133 = por %p131, %p132
      %p134 = scmp.ne.s32.totalorder %s125, %s126
      %p135 = scmp.eq.s32.totalorder %s24, 0
      %p136 = por %p134, %p135
      %p137 = scmp.ne.s32.totalorder %s125, %s126
      %p138 = scmp.eq.s32.totalorder %s25, 3
      %p139 = por %p137, %p138
      %p141 = scmp.ne.s32.totalorder %s126, %s140
      %p142 = scmp.eq.s32.totalorder %s25, 0
      %p143 = por %p141, %p142
      %s144 = ssub.s32 %s26, %s38
      %s145 = ssub.s32 %s27, %s34
      %s146 = sor.u32 %s144, %s145
      %p147 = scmp.eq.s32.totalorder %s146, 0
      %s149 = sadd.s32 %s148, 1
      %s150 = scalar_select %p147, %s148, %s149
      %p153 = pneg %p147
      %p154 = scmp.eq.s32.totalorder %s19, 3
      %p155 = por %p153, %p154
      %p156 = scmp.ne.s32.totalorder %s148, %s151
      %p157 = scmp.eq.s32.totalorder %s19, 0
      %p158 = por %p156, %p157
      %p159 = scmp.ne.s32.totalorder %s148, %s151
      %p160 = scmp.eq.s32.totalorder %s24, 3
      %p161 = por %p159, %p160
      %p162 = scmp.ne.s32.totalorder %s151, %s152
      %p163 = scmp.eq.s32.totalorder %s24, 0
      %p164 = por %p162, %p163
      %p165 = scmp.ne.s32.totalorder %s151, %s152
      %p166 = scmp.eq.s32.totalorder %s25, 3
      %p167 = por %p165, %p166
      %p169 = scmp.ne.s32.totalorder %s152, %s168
      %p170 = scmp.eq.s32.totalorder %s25, 0
      %p171 = por %p169, %p170
      %s172 = ssub.s32 %s26, %s38
      %s173 = ssub.s32 %s27, %s34
      %s174 = sor.u32 %s172, %s173
      %p175 = scmp.eq.s32.totalorder %s174, 0
      %s177 = sadd.s32 %s176, 1
      %s178 = scalar_select %p175, %s176, %s177
      %p181 = pneg %p175
      %p182 = scmp.eq.s32.totalorder %s19, 3
      %p183 = por %p181, %p182
      %p184 = scmp.ne.s32.totalorder %s176, %s179
      %p185 = scmp.eq.s32.totalorder %s19, 0
      %p186 = por %p184, %p185
      %p187 = scmp.ne.s32.totalorder %s176, %s179
      %p188 = scmp.eq.s32.totalorder %s24, 3
      %p189 = por %p187, %p188
      %p190 = scmp.ne.s32.totalorder %s179, %s180
      %p191 = scmp.eq.s32.totalorder %s24, 0
      %p192 = por %p190, %p191
      %p193 = scmp.ne.s32.totalorder %s179, %s180
      %p194 = scmp.eq.s32.totalorder %s25, 3
      %p195 = por %p193, %p194
      %p197 = scmp.ne.s32.totalorder %s180, %s196
      %p198 = scmp.eq.s32.totalorder %s25, 0
      %p199 = por %p197, %p198
      %s200 = ssub.s32 %s26, %s38
      %s201 = ssub.s32 %s27, %s34
      %s202 = sor.u32 %s200, %s201
      %p203 = scmp.eq.s32.totalorder %s202, 0
      %s205 = sadd.s32 %s204, 1
      %s206 = scalar_select %p203, %s204, %s205
      %p209 = pneg %p203
      %p210 = scmp.eq.s32.totalorder %s19, 3
      %p211 = por %p209, %p210
      %p212 = scmp.ne.s32.totalorder %s204, %s207
      %p213 = scmp.eq.s32.totalorder %s19, 0
      %p214 = por %p212, %p213
      %p215 = scmp.ne.s32.totalorder %s204, %s207
      %p216 = scmp.eq.s32.totalorder %s24, 3
      %p217 = por %p215, %p216
      %p218 = scmp.ne.s32.totalorder %s207, %s208
      %p219 = scmp.eq.s32.totalorder %s24, 0
      %p220 = por %p218, %p219
      %p221 = scmp.ne.s32.totalorder %s207, %s208
      %p222 = scmp.eq.s32.totalorder %s25, 3
      %p223 = por %p221, %p222
      %p225 = scmp.ne.s32.totalorder %s208, %s224
      %p226 = scmp.eq.s32.totalorder %s25, 0
      %p227 = por %p225, %p226
      %p228 = scmp.le.s32.totalorder 1, %s19
      %p229 = scmp.lt.s32.totalorder %s19, 5
      %p230 = pnand %p228, %p229
      %p231 = pneg %p230
      // Predicated region
      $region9: #{tpu_custom_call.1} parent=5 // pred_check
        _
      $region10: #{tpu_custom_call.1} parent=5 // pred_check_branch
        %233 = sbr.rel (%p230) target = $region12
      $region11: #{tpu_custom_call.1} parent=5 // pred_region
        %s234 = ssub.s32 %s19, 1
        // Predicated region
        $region13: #{tpu_custom_call.1} parent=11 // pred_check
          %p235 = pneg %p136
        $region14: #{tpu_custom_call.1} parent=11 // pred_check_branch
          %237 = sbr.rel (%p235) target = $region16
        $region15: #{tpu_custom_call.1} parent=11 // pred_region
          _
        $region16: #{tpu_custom_call.1} parent=11 // pred_fallthru
          _
      $region12: #{tpu_custom_call.1} parent=5 // pred_fallthru
        _
      %p238 = scmp.lt.s32.totalorder %s19, 4
      // Predicated region
      $region17: #{tpu_custom_call.1} parent=5 // pred_check
        %p239 = pneg %p238
      $region18: #{tpu_custom_call.1} parent=5 // pred_check_branch
        %241 = sbr.rel (%p239) target = $region20
      $region19: #{tpu_custom_call.1} parent=5 // pred_region
        // Predicated region
        $region21: #{tpu_custom_call.1} parent=19 // pred_check
          %p242 = pneg %p53
        $region22: #{tpu_custom_call.1} parent=19 // pred_check_branch
          %244 = sbr.rel (%p242) target = $region24
        $region23: #{tpu_custom_call.1} parent=19 // pred_region
          %s245 = smul.u32 8, %s27
          %p246 = scmp.lt.s32.totalorder %s26, 1
          %s247 = scalar_select %p246, %s26, 1
          %p248 = scmp.lt.s32.totalorder %s245, 15
          %s249 = scalar_select %p248, %s245, 15
          %s250 = smul.addr %s249, 2
          %s251 = smul.addr %s247, 32
          %s252 = sadd.s32 %s250, %s251
          %s253 = smul.addr %s252, 8
          %s254 = scalar_lea.vmem %s0, %s253
          %s255 = smul.u32 8, %s27
        $region24: #{tpu_custom_call.1} parent=19 // pred_fallthru
          _
        // Predicated region
        $region25: #{tpu_custom_call.1} parent=19 // pred_check
          %p256 = pneg %p81
        $region26: #{tpu_custom_call.1} parent=19 // pred_check_branch
          %258 = sbr.rel (%p256) target = $region28
        $region27: #{tpu_custom_call.1} parent=19 // pred_region
          %p259 = scmp.lt.s32.totalorder %s26, 1
          %s260 = scalar_select %p259, %s26, 1
          %p261 = scmp.lt.s32.totalorder %s27, 1
          %s262 = scalar_select %p261, %s27, 1
          %s263 = smul.addr %s262, 2
          %s264 = smul.addr %s260, 4
          %s265 = sadd.s32 %s263, %s264
          %s266 = smul.addr %s265, 8
          %s267 = scalar_lea.vmem %s1, %s266
        $region28: #{tpu_custom_call.1} parent=19 // pred_fallthru
          _
        // Predicated region
        $region29: #{tpu_custom_call.1} parent=19 // pred_check
          %p268 = pneg %p109
        $region30: #{tpu_custom_call.1} parent=19 // pred_check_branch
          %270 = sbr.rel (%p268) target = $region32
        $region31: #{tpu_custom_call.1} parent=19 // pred_region
          %p271 = scmp.lt.s32.totalorder %s26, 1
          %s272 = scalar_select %p271, %s26, 1
          %p273 = scmp.lt.s32.totalorder %s27, 1
          %s274 = scalar_select %p273, %s27, 1
          %s275 = smul.addr %s274, 2
          %s276 = smul.addr %s272, 4
          %s277 = sadd.s32 %s275, %s276
          %s278 = smul.addr %s277, 8
          %s279 = scalar_lea.vmem %s2, %s278
        $region32: #{tpu_custom_call.1} parent=19 // pred_fallthru
          _
      $region20: #{tpu_custom_call.1} parent=5 // pred_fallthru
        _
      %p280 = scmp.le.s32.totalorder 1, %s19
      %p281 = scmp.lt.s32.totalorder %s19, 5
      %p282 = pnand %p280, %p281
      %p283 = pneg %p282
      // Predicated region
      $region33: #{tpu_custom_call.1} parent=5 // pred_check
        _
      $region34: #{tpu_custom_call.1} parent=5 // pred_check_branch
        %285 = sbr.rel (%p282) target = $region36
      $region35: #{tpu_custom_call.1} parent=5 // pred_region
        %s286 = ssub.s32 %s19, 1
        %s287 = smul.u32 8, %s29
        %p288 = scmp.lt.s32.totalorder %s28, 1
        %s289 = scalar_select %p288, %s28, 1
        %p290 = scmp.lt.s32.totalorder %s287, 15
        %s291 = scalar_select %p290, %s287, 15
        %s292 = smul.addr %s291, 2
        %s293 = smul.addr %s289, 32
        %s294 = sadd.s32 %s292, %s293
        %s295 = smul.addr %s294, 8
        %s296 = scalar_lea.vmem %s0, %s295
        %p297 = pneg %p59
        %p298 = pneg %p56
        %p299 = scmp.lt.s32.totalorder %s28, 1
        %s300 = scalar_select %p299, %s28, 1
        %p301 = scmp.lt.s32.totalorder %s29, 1
        %s302 = scalar_select %p301, %s29, 1
        %s303 = smul.addr %s302, 2
        %s304 = smul.addr %s300, 4
        %s305 = sadd.s32 %s303, %s304
        %s306 = smul.addr %s305, 8
        %s307 = scalar_lea.vmem %s1, %s306
        %p308 = pneg %p87
        %p309 = pneg %p84
        %p310 = scmp.lt.s32.totalorder %s28, 1
        %s311 = scalar_select %p310, %s28, 1
        %p312 = scmp.lt.s32.totalorder %s29, 1
        %s313 = scalar_select %p312, %s29, 1
        %s314 = smul.addr %s313, 2
        %s315 = smul.addr %s311, 4
        %s316 = sadd.s32 %s314, %s315
        %s317 = smul.addr %s316, 8
        %s318 = scalar_lea.vmem %s2, %s317
        %p319 = pneg %p115
        %p320 = pneg %p112
        %p321 = pneg %p136
        %p322 = pneg %p133
        %p323 = pneg %p164
        %p324 = pneg %p161
        %s325 = smul.u32 8, %s29
        %p326 = scmp.lt.s32.totalorder %s28, 1
        %s327 = scalar_select %p326, %s28, 1
        %p328 = scmp.lt.s32.totalorder %s325, 15
        %s329 = scalar_select %p328, %s325, 15
        %s330 = smul.addr %s329, 2
        %s331 = smul.addr %s327, 32
        %s332 = sadd.s32 %s330, %s331
        %s333 = smul.addr %s332, 8
        %s334 = scalar_lea.vmem %s4, %s333
        %p335 = pneg %p192
        %p336 = pneg %p189
        %s337 = sand.u32 %s179, 1
        %s338 = scalar_lea.sflag [#allocation3], %s337
        %s339 = sand.u32 %s179, 1
        %s340 = scalar_lea.vmem [#allocation2], %s339
        %p341 = pneg %p220
        %p342 = pneg %p217
        %s343 = sand.u32 %s207, 1
        %s344 = scalar_lea.sflag [#allocation5], %s343
        %s345 = sand.u32 %s207, 1
        %s346 = scalar_lea.vmem [#allocation4], %s345
        %s347 = smul.u32 8, %s29
        %p348 = scmp.lt.s32.totalorder %s28, 1
        %s349 = scalar_select %p348, %s28, 1
        %p350 = scmp.lt.s32.totalorder %s347, 15
        %s351 = scalar_select %p350, %s347, 15
        %s352 = smul.addr %s351, 2
        %s353 = smul.addr %s349, 32
        %s354 = sadd.s32 %s352, %s353
        %s355 = smul.addr %s354, 8
        %s356 = scalar_lea.vmem %s0, %s355
        %s357 = smul.u32 8, %s29
        %p358 = scmp.lt.s32.totalorder %s28, 1
        %s359 = scalar_select %p358, %s28, 1
        %p360 = scmp.lt.s32.totalorder %s29, 1
        %s361 = scalar_select %p360, %s29, 1
        %s362 = smul.addr %s361, 2
        %s363 = smul.addr %s359, 4
        %s364 = sadd.s32 %s362, %s363
        %s365 = smul.addr %s364, 8
        %s366 = scalar_lea.vmem %s1, %s365
        %p367 = scmp.lt.s32.totalorder %s28, 1
        %s368 = scalar_select %p367, %s28, 1
        %p369 = scmp.lt.s32.totalorder %s29, 1
        %s370 = scalar_select %p369, %s29, 1
        %s371 = smul.addr %s370, 2
        %s372 = smul.addr %s368, 4
        %s373 = sadd.s32 %s371, %s372
        %s374 = smul.addr %s373, 8
        %s375 = scalar_lea.vmem %s2, %s374
        %s376 = smul.u32 8, %s29
        %p377 = scmp.lt.s32.totalorder %s28, 1
        %s378 = scalar_select %p377, %s28, 1
        %p379 = scmp.lt.s32.totalorder %s376, 15
        %s380 = scalar_select %p379, %s376, 15
        %s381 = smul.addr %s380, 2
        %s382 = smul.addr %s378, 32
        %s383 = sadd.s32 %s381, %s382
        %s384 = smul.addr %s383, 8
        %s385 = scalar_lea.vmem %s4, %s384
        %s386 = smul.u32 8, %s29
        %v388 = vld [vmem:[%s356] sm:$0xff]
        %v389 = vld [vmem:[%s356 + $0x8] sm:$0xff]
        %v390 = vld [vmem:[%s356 + $0x10] sm:$0xff]
        %v391 = vld [vmem:[%s356 + $0x18] sm:$0xff]
        %v392 = vld [vmem:[%s356 + $0x20] sm:$0xff]
        %v393 = vld [vmem:[%s356 + $0x28] sm:$0xff]
        %v394 = vld [vmem:[%s356 + $0x30] sm:$0xff]
        %v395 = vld [vmem:[%s356 + $0x38] sm:$0xff]
        %v396 = vld [vmem:[%s356 + $0x40] sm:$0xff]
        %v397 = vld [vmem:[%s356 + $0x48] sm:$0xff]
        %v398 = vld [vmem:[%s356 + $0x50] sm:$0xff]
        %v399 = vld [vmem:[%s356 + $0x58] sm:$0xff]
        %v400 = vld [vmem:[%s356 + $0x60] sm:$0xff]
        %v401 = vld [vmem:[%s356 + $0x68] sm:$0xff]
        %v402 = vld [vmem:[%s356 + $0x70] sm:$0xff]
        %v403 = vld [vmem:[%s356 + $0x78] sm:$0xff]
        %v404 = vld [vmem:[%s366] sm:$0xff]
        %v405 = vld [vmem:[%s366 + $0x8] sm:$0xff]
        %v406 = vld [vmem:[%s375] sm:$0xff]
        %v407 = vld [vmem:[%s375 + $0x8] sm:$0xff]
        %v408 = vld [vmem:[%s3] sm:$0x3]
        %v409 = vpack.c.bf16 %v405, %v404
        %v410 = vpack.c.bf16 %v389, %v388
        %v411 = vpack.c.bf16 %v391, %v390
        %v412 = vpack.c.bf16 %v393, %v392
        %v413 = vpack.c.bf16 %v395, %v394
        %v414 = vpack.c.bf16 %v397, %v396
        %v415 = vpack.c.bf16 %v399, %v398
        %v416 = vpack.c.bf16 %v401, %v400
        %s417 = scalar_lea.vmem %s3, 2
        %v418 = vld [vmem:[%s417] sm:$0x3]
        %v419 = vpack.c.bf16 %v403, %v402
        %vm420 = vcmask 31744
        %v422 = vsel %vm420, %v410, 0
        %v425 = vsel %vm420, %v411, 0
        %v428 = vsel %vm420, %v412, 0
        %v431 = vsel %vm420, %v413, 0
        %v434 = vsel %vm420, %v414, 0
        %v437 = vsel %vm420, %v415, 0
        %v440 = vsel %vm420, %v416, 0
        %v443 = vsel %vm420, %v419, 0
        %vm445 = vcmask 1041408
        %v447 = vsel %vm445, %v418, 0
        %449 = vmatprep.subr.bf16.mxu0 0
        %450 = vmatpush1.bf16.msra.mxu0 %v447
        %451 = vmatprep.subr.bf16.mxu0 0
        %452 = vmatpush1.bf16.msra.mxu0 0
        %453 = vmatprep.subr.bf16.mxu0 0
        %454 = vmatpush1.bf16.msra.mxu0 0
        %455 = vmatprep.subr.bf16.mxu0 0
        %456 = vmatpush1.bf16.msra.mxu0 0
        %457 = vmatprep.subr.bf16.mxu0 0
        %458 = vmatpush1.bf16.msra.mxu0 0
        %459 = vmatprep.subr.bf16.mxu0 0
        %460 = vmatpush1.bf16.msra.mxu0 0
        %461 = vmatprep.subr.bf16.mxu0 0
        %462 = vmatpush1.bf16.msra.mxu0 0
        %463 = vmatprep.subr.bf16.mxu0 0
        %464 = vmatpush1.bf16.msra.mxu0 0
        %465 = vmatprep.subr.bf16.mxu0 0
        %466 = vmatpush1.bf16.msra.mxu0 0
        %467 = vmatprep.subr.bf16.mxu0 0
        %468 = vmatpush1.bf16.msra.mxu0 0
        %469 = vmatprep.subr.bf16.mxu0 0
        %470 = vmatpush1.bf16.msra.mxu0 0
        %471 = vmatprep.subr.bf16.mxu0 0
        %472 = vmatpush1.bf16.msra.mxu0 0
        %473 = vmatprep.subr.bf16.mxu0 0
        %474 = vmatpush1.bf16.msra.mxu0 0
        %475 = vmatprep.subr.bf16.mxu0 0
        %476 = vmatpush1.bf16.msra.mxu0 0
        %477 = vmatprep.subr.bf16.mxu0 0
        %478 = vmatpush1.bf16.msra.mxu0 0
        %479 = vmatprep.subr.bf16.mxu0 0
        %480 = vmatpush1.bf16.msra.mxu0 0
        %481 = vmatprep.mubr.bf16.mxu0 0
        %482 = vmatmul.mubr.bf16.gmra.mrb[0].mxu0 %v422
        %v483 = vpop.f32.mrb[0].mxu0
        %v484 = vadd.f32 0.0, %v483
        %v485 = vpop.f32.mrb[0].mxu0
        %v486 = vpop.f32.mrb[0].mxu0
        %v487 = vadd.f32 0.0, %v486
        %v488 = vpop.f32.mrb[0].mxu0
        %489 = vmatprep.mubr.bf16.mxu0 0
        %490 = vmatmul.mubr.bf16.gmra.mrb[0].mxu0 %v425
        %v491 = vpop.f32.mrb[0].mxu0
        %v492 = vadd.f32 0.0, %v491
        %v493 = vpop.f32.mrb[0].mxu0
        %v494 = vpop.f32.mrb[0].mxu0
        %v495 = vadd.f32 0.0, %v494
        %v496 = vpop.f32.mrb[0].mxu0
        %497 = vmatprep.mubr.bf16.mxu0 0
        %498 = vmatmul.mubr.bf16.gmra.mrb[0].mxu0 %v428
        %v499 = vpop.f32.mrb[0].mxu0
        %v500 = vadd.f32 0.0, %v499
        %v501 = vpop.f32.mrb[0].mxu0
        %v502 = vpop.f32.mrb[0].mxu0
        %v503 = vadd.f32 0.0, %v502
        %v504 = vpop.f32.mrb[0].mxu0
        %505 = vmatprep.mubr.bf16.mxu0 0
        %506 = vmatmul.mubr.bf16.gmra.mrb[0].mxu0 %v431
        %v507 = vpop.f32.mrb[0].mxu0
        %v508 = vadd.f32 0.0, %v507
        %v509 = vpop.f32.mrb[0].mxu0
        %v510 = vpop.f32.mrb[0].mxu0
        %v511 = vadd.f32 0.0, %v510
        %v512 = vpop.f32.mrb[0].mxu0
        %513 = vmatprep.mubr.bf16.mxu0 0
        %514 = vmatmul.mubr.bf16.gmra.mrb[0].mxu0 %v434
        %v515 = vpop.f32.mrb[0].mxu0
        %v516 = vadd.f32 0.0, %v515
        %v517 = vpop.f32.mrb[0].mxu0
        %v518 = vpop.f32.mrb[0].mxu0
        %v519 = vadd.f32 0.0, %v518
        %v520 = vpop.f32.mrb[0].mxu0
        %521 = vmatprep.mubr.bf16.mxu0 0
        %522 = vmatmul.mubr.bf16.gmra.mrb[0].mxu0 %v437
        %v523 = vpop.f32.mrb[0].mxu0
        %v524 = vadd.f32 0.0, %v523
        %v525 = vpop.f32.mrb[0].mxu0
        %v526 = vpop.f32.mrb[0].mxu0
        %v527 = vadd.f32 0.0, %v526
        %v528 = vpop.f32.mrb[0].mxu0
        %529 = vmatprep.mubr.bf16.mxu0 0
        %530 = vmatmul.mubr.bf16.gmra.mrb[0].mxu0 %v440
        %v531 = vpop.f32.mrb[0].mxu0
        %v532 = vadd.f32 0.0, %v531
        %v533 = vpop.f32.mrb[0].mxu0
        %v534 = vpop.f32.mrb[0].mxu0
        %v535 = vadd.f32 0.0, %v534
        %v536 = vpop.f32.mrb[0].mxu0
        %537 = vmatprep.mubr.bf16.mxu0 0
        %538 = vmatmul.mubr.bf16.gmra.mrb[0].mxu0 %v443
        %v539 = vpop.f32.mrb[0].mxu0
        %v540 = vadd.f32 0.0, %v539
        %v541 = vpop.f32.mrb[0].mxu0
        %v542 = vpop.f32.mrb[0].mxu0
        %v543 = vadd.f32 0.0, %v542
        %v544 = vpop.f32.mrb[0].mxu0
        %545 = vdwg.mxu0
        %v547 = vsel %vm420, %v409, 0
        %v550 = vsel %vm445, %v408, 0
        %552 = vmatprep.subr.bf16.mxu0 0
        %553 = vmatpush1.bf16.msra.mxu0 %v550
        %554 = vmatprep.subr.bf16.mxu0 0
        %555 = vmatpush1.bf16.msra.mxu0 0
        %556 = vmatprep.subr.bf16.mxu0 0
        %557 = vmatpush1.bf16.msra.mxu0 0
        %558 = vmatprep.subr.bf16.mxu0 0
        %559 = vmatpush1.bf16.msra.mxu0 0
        %560 = vmatprep.subr.bf16.mxu0 0
        %561 = vmatpush1.bf16.msra.mxu0 0
        %562 = vmatprep.subr.bf16.mxu0 0
        %563 = vmatpush1.bf16.msra.mxu0 0
        %564 = vmatprep.subr.bf16.mxu0 0
        %565 = vmatpush1.bf16.msra.mxu0 0
        %566 = vmatprep.subr.bf16.mxu0 0
        %567 = vmatpush1.bf16.msra.mxu0 0
        %568 = vmatprep.subr.bf16.mxu0 0
        %569 = vmatpush1.bf16.msra.mxu0 0
        %570 = vmatprep.subr.bf16.mxu0 0
        %571 = vmatpush1.bf16.msra.mxu0 0
        %572 = vmatprep.subr.bf16.mxu0 0
        %573 = vmatpush1.bf16.msra.mxu0 0
        %574 = vmatprep.subr.bf16.mxu0 0
        %575 = vmatpush1.bf16.msra.mxu0 0
        %576 = vmatprep.subr.bf16.mxu0 0
        %577 = vmatpush1.bf16.msra.mxu0 0
        %578 = vmatprep.subr.bf16.mxu0 0
        %579 = vmatpush1.bf16.msra.mxu0 0
        %580 = vmatprep.subr.bf16.mxu0 0
        %581 = vmatpush1.bf16.msra.mxu0 0
        %582 = vmatprep.subr.bf16.mxu0 0
        %583 = vmatpush1.bf16.msra.mxu0 0
        %584 = vmatprep.mubr.bf16.mxu0 0
        %585 = vmatmul.mubr.bf16.gmra.mrb[0].mxu0 %v547
        %v586 = vpop.f32.mrb[0].mxu0
        %v587 = vadd.f32 %v484, %v586
        %v588 = vpop.f32.mrb[0].mxu0
        %v589 = vpop.f32.mrb[0].mxu0
        %v590 = vadd.f32 %v487, %v589
        %v591 = vpop.f32.mrb[0].mxu0
        %592 = vmatprep.mubr.bf16.mxu0 0
        %593 = vmatmul.mubr.bf16.gmra.mrb[0].mxu0 %v422
        %v594 = vpop.f32.mrb[0].mxu0
        %v595 = vadd.f32 %v492, %v594
        %v596 = vpop.f32.mrb[0].mxu0
        %v597 = vpop.f32.mrb[0].mxu0
        %v598 = vadd.f32 %v495, %v597
        %v599 = vpop.f32.mrb[0].mxu0
        %600 = vmatprep.mubr.bf16.mxu0 0
        %601 = vmatmul.mubr.bf16.gmra.mrb[0].mxu0 %v425
        %v602 = vpop.f32.mrb[0].mxu0
        %v603 = vadd.f32 %v500, %v602
        %v604 = vpop.f32.mrb[0].mxu0
        %v605 = vpop.f32.mrb[0].mxu0
        %v606 = vadd.f32 %v503, %v605
        %v607 = vpop.f32.mrb[0].mxu0
        %608 = vmatprep.mubr.bf16.mxu0 0
        %609 = vmatmul.mubr.bf16.gmra.mrb[0].mxu0 %v428
        %v610 = vpop.f32.mrb[0].mxu0
        %v611 = vadd.f32 %v508, %v610
        %v612 = vpop.f32.mrb[0].mxu0
        %v613 = vpop.f32.mrb[0].mxu0
        %v614 = vadd.f32 %v511, %v613
        %v615 = vpop.f32.mrb[0].mxu0
        %616 = vmatprep.mubr.bf16.mxu0 0
        %617 = vmatmul.mubr.bf16.gmra.mrb[0].mxu0 %v431
        %v618 = vpop.f32.mrb[0].mxu0
        %v619 = vadd.f32 %v516, %v618
        %v620 = vpop.f32.mrb[0].mxu0
        %v621 = vpop.f32.mrb[0].mxu0
        %v622 = vadd.f32 %v519, %v621
        %v623 = vpop.f32.mrb[0].mxu0
        %624 = vmatprep.mubr.bf16.mxu0 0
        %625 = vmatmul.mubr.bf16.gmra.mrb[0].mxu0 %v434
        %v626 = vpop.f32.mrb[0].mxu0
        %v627 = vadd.f32 %v524, %v626
        %v628 = vpop.f32.mrb[0].mxu0
        %v629 = vpop.f32.mrb[0].mxu0
        %v630 = vadd.f32 %v527, %v629
        %v631 = vpop.f32.mrb[0].mxu0
        %632 = vmatprep.mubr.bf16.mxu0 0
        %633 = vmatmul.mubr.bf16.gmra.mrb[0].mxu0 %v437
        %v634 = vpop.f32.mrb[0].mxu0
        %v635 = vadd.f32 %v532, %v634
        %v636 = vpop.f32.mrb[0].mxu0
        %v637 = vpop.f32.mrb[0].mxu0
        %v638 = vadd.f32 %v535, %v637
        %v639 = vpop.f32.mrb[0].mxu0
        %640 = vmatprep.mubr.bf16.mxu0 0
        %641 = vmatmul.mubr.bf16.gmra.mrb[0].mxu0 %v440
        %v642 = vpop.f32.mrb[0].mxu0
        %v643 = vadd.f32 %v540, %v642
        %v644 = vpop.f32.mrb[0].mxu0
        %v645 = vpop.f32.mrb[0].mxu0
        %v646 = vadd.f32 %v543, %v645
        %v647 = vpop.f32.mrb[0].mxu0
        %648 = vdwg.mxu0
        %s649 = scalar_lea.vmem %s3, 4
        %v650 = vld [vmem:[%s649] sm:$0x3]
        %v651 = vpack.c.bf16 %v407, %v406
        %v653 = vsel %vm420, %v651, 0
        %v656 = vsel %vm445, %v650, 0
        %658 = vmatprep.subr.bf16.mxu0 0
        %659 = vmatpush1.bf16.msra.mxu0 %v656
        %660 = vmatprep.subr.bf16.mxu0 0
        %661 = vmatpush1.bf16.msra.mxu0 0
        %662 = vmatprep.subr.bf16.mxu0 0
        %663 = vmatpush1.bf16.msra.mxu0 0
        %664 = vmatprep.subr.bf16.mxu0 0
        %665 = vmatpush1.bf16.msra.mxu0 0
        %666 = vmatprep.subr.bf16.mxu0 0
        %667 = vmatpush1.bf16.msra.mxu0 0
        %668 = vmatprep.subr.bf16.mxu0 0
        %669 = vmatpush1.bf16.msra.mxu0 0
        %670 = vmatprep.subr.bf16.mxu0 0
        %671 = vmatpush1.bf16.msra.mxu0 0
        %672 = vmatprep.subr.bf16.mxu0 0
        %673 = vmatpush1.bf16.msra.mxu0 0
        %674 = vmatprep.subr.bf16.mxu0 0
        %675 = vmatpush1.bf16.msra.mxu0 0
        %676 = vmatprep.subr.bf16.mxu0 0
        %677 = vmatpush1.bf16.msra.mxu0 0
        %678 = vmatprep.subr.bf16.mxu0 0
        %679 = vmatpush1.bf16.msra.mxu0 0
        %680 = vmatprep.subr.bf16.mxu0 0
        %681 = vmatpush1.bf16.msra.mxu0 0
        %682 = vmatprep.subr.bf16.mxu0 0
        %683 = vmatpush1.bf16.msra.mxu0 0
        %684 = vmatprep.subr.bf16.mxu0 0
        %685 = vmatpush1.bf16.msra.mxu0 0
        %686 = vmatprep.subr.bf16.mxu0 0
        %687 = vmatpush1.bf16.msra.mxu0 0
        %688 = vmatprep.subr.bf16.mxu0 0
        %689 = vmatpush1.bf16.msra.mxu0 0
        %690 = vmatprep.mubr.bf16.mxu0 0
        %691 = vmatmul.mubr.bf16.gmra.mrb[0].mxu0 %v425
        %v692 = vpop.f32.mrb[0].mxu0
        %v693 = vadd.f32 0.0, %v692
        %v694 = vpop.f32.mrb[0].mxu0
        %v695 = vpop.f32.mrb[0].mxu0
        %v696 = vadd.f32 0.0, %v695
        %v697 = vpop.f32.mrb[0].mxu0
        %698 = vmatprep.mubr.bf16.mxu0 0
        %699 = vmatmul.mubr.bf16.gmra.mrb[0].mxu0 %v428
        %v700 = vpop.f32.mrb[0].mxu0
        %v701 = vadd.f32 0.0, %v700
        %v702 = vpop.f32.mrb[0].mxu0
        %v703 = vpop.f32.mrb[0].mxu0
        %v704 = vadd.f32 0.0, %v703
        %v705 = vpop.f32.mrb[0].mxu0
        %706 = vmatprep.mubr.bf16.mxu0 0
        %707 = vmatmul.mubr.bf16.gmra.mrb[0].mxu0 %v431
        %v708 = vpop.f32.mrb[0].mxu0
        %v709 = vadd.f32 0.0, %v708
        %v710 = vpop.f32.mrb[0].mxu0
        %v711 = vpop.f32.mrb[0].mxu0
        %v712 = vadd.f32 0.0, %v711
        %v713 = vpop.f32.mrb[0].mxu0
        %714 = vmatprep.mubr.bf16.mxu0 0
        %715 = vmatmul.mubr.bf16.gmra.mrb[0].mxu0 %v434
        %v716 = vpop.f32.mrb[0].mxu0
        %v717 = vadd.f32 0.0, %v716
        %v718 = vpop.f32.mrb[0].mxu0
        %v719 = vpop.f32.mrb[0].mxu0
        %v720 = vadd.f32 0.0, %v719
        %v721 = vpop.f32.mrb[0].mxu0
        %722 = vmatprep.mubr.bf16.mxu0 0
        %723 = vmatmul.mubr.bf16.gmra.mrb[0].mxu0 %v437
        %v724 = vpop.f32.mrb[0].mxu0
        %v725 = vadd.f32 0.0, %v724
        %v726 = vpop.f32.mrb[0].mxu0
        %v727 = vpop.f32.mrb[0].mxu0
        %v728 = vadd.f32 0.0, %v727
        %v729 = vpop.f32.mrb[0].mxu0
        %730 = vmatprep.mubr.bf16.mxu0 0
        %731 = vmatmul.mubr.bf16.gmra.mrb[0].mxu0 %v440
        %v732 = vpop.f32.mrb[0].mxu0
        %v733 = vadd.f32 0.0, %v732
        %v734 = vpop.f32.mrb[0].mxu0
        %v735 = vpop.f32.mrb[0].mxu0
        %v736 = vadd.f32 0.0, %v735
        %v737 = vpop.f32.mrb[0].mxu0
        %738 = vmatprep.mubr.bf16.mxu0 0
        %739 = vmatmul.mubr.bf16.gmra.mrb[0].mxu0 %v443
        %v740 = vpop.f32.mrb[0].mxu0
        %v741 = vadd.f32 0.0, %v740
        %v742 = vpop.f32.mrb[0].mxu0
        %v743 = vpop.f32.mrb[0].mxu0
        %v744 = vadd.f32 0.0, %v743
        %v745 = vpop.f32.mrb[0].mxu0
        %746 = vmatprep.mubr.bf16.mxu0 0
        %747 = vmatmul.mubr.bf16.gmra.mrb[0].mxu0 %v653
        %v748 = vpop.f32.mrb[0].mxu0
        %v749 = vadd.f32 0.0, %v748
        %v750 = vpop.f32.mrb[0].mxu0
        %v751 = vpop.f32.mrb[0].mxu0
        %v752 = vadd.f32 0.0, %v751
        %v753 = vpop.f32.mrb[0].mxu0
        %754 = vdwg.mxu0
        %v755 = vadd.f32 %v587, %v693
        %v756 = vadd.f32 %v590, %v696
        %v757 = vadd.f32 %v595, %v701
        %v758 = vadd.f32 %v598, %v704
        %v759 = vadd.f32 %v603, %v709
        %v760 = vadd.f32 %v606, %v712
        %v761 = vadd.f32 %v611, %v717
        %v762 = vadd.f32 %v614, %v720
        %v763 = vadd.f32 %v619, %v725
        %v764 = vadd.f32 %v622, %v728
        %v765 = vadd.f32 %v627, %v733
        %v766 = vadd.f32 %v630, %v736
        %v767 = vadd.f32 %v635, %v741
        %v768 = vadd.f32 %v638, %v744
        %v769 = vadd.f32 %v643, %v749
        %v770 = vadd.f32 %v646, %v752
        %771 = vst.msk [vmem:[%s385] sm:$0xff] %vm420, %v755
        %772 = vst.msk [vmem:[%s385 + $0x8] sm:$0xff] %vm420, %v756
        %773 = vst.msk [vmem:[%s385 + $0x10] sm:$0xff] %vm420, %v757
        %774 = vst.msk [vmem:[%s385 + $0x18] sm:$0xff] %vm420, %v758
        %775 = vst.msk [vmem:[%s385 + $0x20] sm:$0xff] %vm420, %v759
        %776 = vst.msk [vmem:[%s385 + $0x28] sm:$0xff] %vm420, %v760
        %777 = vst.msk [vmem:[%s385 + $0x30] sm:$0xff] %vm420, %v761
        %778 = vst.msk [vmem:[%s385 + $0x38] sm:$0xff] %vm420, %v762
        %779 = vst.msk [vmem:[%s385 + $0x40] sm:$0xff] %vm420, %v763
        %780 = vst.msk [vmem:[%s385 + $0x48] sm:$0xff] %vm420, %v764
        %781 = vst.msk [vmem:[%s385 + $0x50] sm:$0xff] %vm420, %v765
        %782 = vst.msk [vmem:[%s385 + $0x58] sm:$0xff] %vm420, %v766
        %783 = vst.msk [vmem:[%s385 + $0x60] sm:$0xff] %vm420, %v767
        %784 = vst.msk [vmem:[%s385 + $0x68] sm:$0xff] %vm420, %v768
        %785 = vst.msk [vmem:[%s385 + $0x70] sm:$0xff] %vm420, %v769
        %786 = vst.msk [vmem:[%s385 + $0x78] sm:$0xff] %vm420, %v770
        %v787 = vsel %vm420, %v755, 0.0
        %v788 = vsel %vm420, %v756, 0.0
        %v789 = vadd.f32 %v787, %v788
        %v790 = vsel %vm420, %v757, 0.0
        %v791 = vadd.f32 %v789, %v790
        %v792 = vsel %vm420, %v758, 0.0
        %v793 = vadd.f32 %v791, %v792
        %v794 = vsel %vm420, %v759, 0.0
        %v795 = vadd.f32 %v793, %v794
        %v796 = vsel %vm420, %v760, 0.0
        %v797 = vadd.f32 %v795, %v796
        %v798 = vsel %vm420, %v761, 0.0
        %v799 = vadd.f32 %v797, %v798
        %v800 = vsel %vm420, %v762, 0.0
        %v801 = vadd.f32 %v799, %v800
        %v802 = vsel %vm420, %v763, 0.0
        %v803 = vadd.f32 %v801, %v802
        %v804 = vsel %vm420, %v764, 0.0
        %v805 = vadd.f32 %v803, %v804
        %v806 = vsel %vm420, %v765, 0.0
        %v807 = vadd.f32 %v805, %v806
        %v808 = vsel %vm420, %v766, 0.0
        %v809 = vadd.f32 %v807, %v808
        %v810 = vsel %vm420, %v767, 0.0
        %v811 = vadd.f32 %v809, %v810
        %v812 = vsel %vm420, %v768, 0.0
        %v813 = vadd.f32 %v811, %v812
        %v814 = vsel %vm420, %v769, 0.0
        %v815 = vadd.f32 %v813, %v814
        %v816 = vsel %vm420, %v770, 0.0
        %v817 = vadd.f32 %v815, %v816
        %v818 = vrot.slane %v817, 4
        %v819 = vadd.f32 %v817, %v818
        %v820 = vrot.slane %v819, 2
        %v821 = vadd.f32 %v819, %v820
        %v822 = vrot.slane %v821, 1
        %v823 = vadd.f32 %v821, %v822
        %vm824 = vcmask 24576
        %825 = vst.msk [vmem:[%s340] sm:$0x1] %vm824, %v823
        %v826 = vmul.f32 %v755, %v755
        %v827 = vmul.f32 %v756, %v756
        %v828 = vmul.f32 %v757, %v757
        %v829 = vmul.f32 %v758, %v758
        %v830 = vmul.f32 %v759, %v759
        %v831 = vmul.f32 %v760, %v760
        %v832 = vmul.f32 %v761, %v761
        %v833 = vmul.f32 %v762, %v762
        %v834 = vmul.f32 %v763, %v763
        %v835 = vmul.f32 %v764, %v764
        %v836 = vmul.f32 %v765, %v765
        %v837 = vmul.f32 %v766, %v766
        %v838 = vmul.f32 %v767, %v767
        %v839 = vmul.f32 %v768, %v768
        %v840 = vmul.f32 %v769, %v769
        %v841 = vmul.f32 %v770, %v770
        %v842 = vsel %vm420, %v826, 0.0
        %v843 = vsel %vm420, %v827, 0.0
        %v844 = vadd.f32 %v842, %v843
        %v845 = vsel %vm420, %v828, 0.0
        %v846 = vadd.f32 %v844, %v845
        %v847 = vsel %vm420, %v829, 0.0
        %v848 = vadd.f32 %v846, %v847
        %v849 = vsel %vm420, %v830, 0.0
        %v850 = vadd.f32 %v848, %v849
        %v851 = vsel %vm420, %v831, 0.0
        %v852 = vadd.f32 %v850, %v851
        %v853 = vsel %vm420, %v832, 0.0
        %v854 = vadd.f32 %v852, %v853
        %v855 = vsel %vm420, %v833, 0.0
        %v856 = vadd.f32 %v854, %v855
        %v857 = vsel %vm420, %v834, 0.0
        %v858 = vadd.f32 %v856, %v857
        %v859 = vsel %vm420, %v835, 0.0
        %v860 = vadd.f32 %v858, %v859
        %v861 = vsel %vm420, %v836, 0.0
        %v862 = vadd.f32 %v860, %v861
        %v863 = vsel %vm420, %v837, 0.0
        %v864 = vadd.f32 %v862, %v863
        %v865 = vsel %vm420, %v838, 0.0
        %v866 = vadd.f32 %v864, %v865
        %v867 = vsel %vm420, %v839, 0.0
        %v868 = vadd.f32 %v866, %v867
        %v869 = vsel %vm420, %v840, 0.0
        %v870 = vadd.f32 %v868, %v869
        %v871 = vsel %vm420, %v841, 0.0
        %v872 = vadd.f32 %v870, %v871
        %v873 = vrot.slane %v872, 4
        %v874 = vadd.f32 %v872, %v873
        %v875 = vrot.slane %v874, 2
        %v876 = vadd.f32 %v874, %v875
        %v877 = vrot.slane %v876, 1
        %v878 = vadd.f32 %v876, %v877
        %879 = vst.msk [vmem:[%s346] sm:$0x1] %vm824, %v878
        %s880 = smul.u32 8, %s29
        %p881 = scmp.lt.s32.totalorder %s28, 1
        %s882 = scalar_select %p881, %s28, 1
        %p883 = scmp.lt.s32.totalorder %s880, 15
        %s884 = scalar_select %p883, %s880, 15
        %s885 = smul.addr %s884, 2
        %s886 = smul.addr %s882, 32
        %s887 = sadd.s32 %s885, %s886
        %s888 = smul.addr %s887, 8
        %s889 = scalar_lea.vmem %s4, %s888
        %s890 = sand.u32 %s179, 1
        %s891 = scalar_lea.sflag [#allocation3], %s890
        %s892 = sand.u32 %s179, 1
        %s893 = scalar_lea.vmem [#allocation2], %s892
        %s894 = sand.u32 %s207, 1
        %s895 = scalar_lea.sflag [#allocation5], %s894
        %s896 = sand.u32 %s207, 1
        %s897 = scalar_lea.vmem [#allocation4], %s896
        // Predicated region
        $region37: #{tpu_custom_call.1} parent=35 // pred_check
          %p898 = pneg %p161
        $region38: #{tpu_custom_call.1} parent=35 // pred_check_branch
          %900 = sbr.rel (%p898) target = $region40
        $region39: #{tpu_custom_call.1} parent=35 // pred_region
          %s901 = smul.u32 8, %s29
        $region40: #{tpu_custom_call.1} parent=35 // pred_fallthru
          _
        // Predicated region
        $region41: #{tpu_custom_call.1} parent=35 // pred_check
          %p902 = pneg %p189
        $region42: #{tpu_custom_call.1} parent=35 // pred_check_branch
          %904 = sbr.rel (%p902) target = $region44
        $region43: #{tpu_custom_call.1} parent=35 // pred_region
          %s906 = ssub.s32 16, 16
          %907 = vsyncadd %s891, %s906
          %s908 = smul.addr %s28, 2
          %s909 = sadd.s32 %s29, %s908
          %s910 = smul.addr %s909, 16
          %s911 = scalar_lea.hbm %s5, %s910
          %s913 = sshll.u32 %s893, 4
          %s914 = int_to_ptr.vmem [resolvable:$true] %s913
          %916 = dma.vmem_to_hbm [thread:$0]  %s914, 16, %s911, %s891
        $region44: #{tpu_custom_call.1} parent=35 // pred_fallthru
          _
        // Predicated region
        $region45: #{tpu_custom_call.1} parent=35 // pred_check
          %p917 = pneg %p217
        $region46: #{tpu_custom_call.1} parent=35 // pred_check_branch
          %919 = sbr.rel (%p917) target = $region48
        $region47: #{tpu_custom_call.1} parent=35 // pred_region
          %s921 = ssub.s32 16, 16
          %922 = vsyncadd %s895, %s921
          %s923 = smul.addr %s28, 2
          %s924 = sadd.s32 %s29, %s923
          %s925 = smul.addr %s924, 16
          %s926 = scalar_lea.hbm %s6, %s925
          %s928 = sshll.u32 %s897, 4
          %s929 = int_to_ptr.vmem [resolvable:$true] %s928
          %931 = dma.vmem_to_hbm [thread:$0]  %s929, 16, %s926, %s895
        $region48: #{tpu_custom_call.1} parent=35 // pred_fallthru
          _
      $region36: #{tpu_custom_call.1} parent=5 // pred_fallthru
        _
      %p932 = scmp.le.s32.totalorder 2, %s19
      // Predicated region
      $region49: #{tpu_custom_call.1} parent=5 // pred_check
        %p933 = pneg %p932
      $region50: #{tpu_custom_call.1} parent=5 // pred_check_branch
        %935 = sbr.rel (%p933) target = $region52
      $region51: #{tpu_custom_call.1} parent=5 // pred_region
        %s936 = ssub.s32 %s19, 2
        // Predicated region
        $region53: #{tpu_custom_call.1} parent=51 // pred_check
          %p937 = pneg %p167
        $region54: #{tpu_custom_call.1} parent=51 // pred_check_branch
          %939 = sbr.rel (%p937) target = $region56
        $region55: #{tpu_custom_call.1} parent=51 // pred_region
          %s940 = smul.u32 8, %s31
          %p941 = scmp.lt.s32.totalorder %s30, 1
          %s942 = scalar_select %p941, %s30, 1
          %p943 = scmp.lt.s32.totalorder %s940, 15
          %s944 = scalar_select %p943, %s940, 15
          %s945 = smul.addr %s944, 2
          %s946 = smul.addr %s942, 32
          %s947 = sadd.s32 %s945, %s946
          %s948 = smul.addr %s947, 8
          %s949 = scalar_lea.vmem %s4, %s948
        $region56: #{tpu_custom_call.1} parent=51 // pred_fallthru
          _
        // Predicated region
        $region57: #{tpu_custom_call.1} parent=51 // pred_check
          %p950 = pneg %p195
        $region58: #{tpu_custom_call.1} parent=51 // pred_check_branch
          %952 = sbr.rel (%p950) target = $region60
        $region59: #{tpu_custom_call.1} parent=51 // pred_region
          %s953 = sand.u32 %s180, 1
          %s954 = scalar_lea.sflag [#allocation3], %s953
          %s955 = sand.u32 %s180, 1
          %s956 = scalar_lea.vmem [#allocation2], %s955
          %957 = dma.done %s954, 16
        $region60: #{tpu_custom_call.1} parent=51 // pred_fallthru
          _
        // Predicated region
        $region61: #{tpu_custom_call.1} parent=51 // pred_check
          %p958 = pneg %p223
        $region62: #{tpu_custom_call.1} parent=51 // pred_check_branch
          %960 = sbr.rel (%p958) target = $region64
        $region63: #{tpu_custom_call.1} parent=51 // pred_region
          %s961 = sand.u32 %s208, 1
          %s962 = scalar_lea.sflag [#allocation5], %s961
          %s963 = sand.u32 %s208, 1
          %s964 = scalar_lea.vmem [#allocation4], %s963
          %965 = dma.done %s962, 16
        $region64: #{tpu_custom_call.1} parent=51 // pred_fallthru
          _
      $region52: #{tpu_custom_call.1} parent=5 // pred_fallthru
        _
    $region6: #{tpu_custom_call.1} parent=1 // loop_footer
      %s23 = sadd.s32 1, %s19
    $region7: #{tpu_custom_call.1} parent=1 // loop_footer_branch
      %18 = sbr.rel target = $region3
    $region8: #{tpu_custom_call.1} parent=1 // loop_exit
      _
    %966 = vsyncpa [#allocation3], 1
    %s967 = scalar_lea.sflag [#allocation3], 1
    %968 = vsyncpa %s967, 1
    %969 = vsyncpa [#allocation5], 1
    %s970 = scalar_lea.sflag [#allocation5], 1
    %971 = vsyncpa %s970, 1

</llo_original>
